<compile_context>
chip_gen: v7x
topology: tpu7x:2x2x1
jax: 0.10.0
libtpu: 0.0.40
codegen_flags: <defaults>
</compile_context>

<pallas_src>
import functools

import jax
import jax.numpy as jnp
from jax import lax
from jax.experimental import pallas as pl
from jax.experimental.pallas import tpu as pltpu


def _ln_packed_kernel(x_ref, a_ref, w_ref, b_ref, o_ref, *, eps):
    """Lane-packed LayerNorm tile.

    x_ref: (TR, L) with L = P * d_model = 128 lanes; each consecutive group of
    d_model lanes is one logical (batch, pos) row.  a_ref is the hoisted
    block-diagonal averaging matrix, so `x @ A` is the per-group mean broadcast
    to every lane of its group (one MXU pass; all loads/stores lane-dense).
    """
    x = x_ref[...].astype(jnp.float32)                      # (TR, L)
    a = a_ref[...]                                          # (L, L) f32, resident
    mean = jnp.dot(x, a, preferred_element_type=jnp.float32)
    xc = x - mean
    var = jnp.dot(xc * xc, a, preferred_element_type=jnp.float32)
    inv = lax.rsqrt(jnp.maximum(var, 0.0) + jnp.float32(eps))
    y = xc * inv * w_ref[...].astype(jnp.float32) + b_ref[...].astype(jnp.float32)
    o_ref[...] = y.astype(o_ref.dtype)


def _ln_rows_kernel(x_ref, w_ref, b_ref, o_ref, *, eps):
    """Plain row-tiled LayerNorm (d_model is the full lane axis)."""
    x = x_ref[...].astype(jnp.float32)                      # (TR, D)
    mean = jnp.mean(x, axis=-1, keepdims=True)
    xc = x - mean
    var = jnp.mean(xc * xc, axis=-1, keepdims=True)
    inv = lax.rsqrt(jnp.maximum(var, 0.0) + jnp.float32(eps))
    y = xc * inv * w_ref[...].astype(jnp.float32) + b_ref[...].astype(jnp.float32)
    o_ref[...] = y.astype(o_ref.dtype)


def _vmem_capacity_bytes():
    try:
        info = pltpu.get_tpu_info()
        cap = getattr(info, "vmem_capacity_bytes", None)
        if cap:
            return int(cap)
    except Exception:
        pass
    return 64 * 1024 * 1024          # conservative: v7x per-TensorCore VMEM


def _round_up(v, m):
    return ((v + m - 1) // m) * m


def layernorm(resid, w, b, *, eps=1e-5):
    """resid: [batch, pos, d_model]; w, b: [d_model]."""
    batch, pos, d_model = resid.shape
    n_rows = batch * pos
    x2d = resid.reshape(n_rows, d_model)
    itemsize = jnp.dtype(resid.dtype).itemsize

    # Lane-pack P = 128 // d_model logical rows per 128-lane row when possible
    # (keeps every vector load/store and the output DMA lane-dense).
    pack = (d_model < 128) and (128 % d_model == 0) and (n_rows % (128 // d_model) == 0)
    if pack:
        p = 128 // d_model
        lanes = 128
        rows = n_rows // p
        xk = x2d.reshape(rows, lanes)                 # row-major reshape: free
        wk = jnp.tile(w, p).reshape(1, lanes)
        bk = jnp.tile(b, p).reshape(1, lanes)
        grp = jnp.arange(lanes, dtype=jnp.int32) // d_model
        a_mat = (grp[:, None] == grp[None, :]).astype(jnp.float32) / jnp.float32(d_model)
        kernel = functools.partial(_ln_packed_kernel, eps=eps)
    else:
        lanes = d_model                               # never split the reduction axis
        rows = n_rows
        xk = x2d
        wk = w.reshape(1, lanes)
        bk = b.reshape(1, lanes)
        a_mat = None
        kernel = functools.partial(_ln_rows_kernel, eps=eps)

    # ---- Tile sizing: generation-aware VMEM budget, dtype-aware sublanes ----
    g = max(8, 32 // itemsize)                        # f32 -> 8, bf16 -> 16, int8/fp8 -> 32
    bytes_per_row = lanes * itemsize

    vmem_cap = _vmem_capacity_bytes()
    # v7x (64 MiB/TC) -> 48 MiB scoped; v5e/v6e (128 MiB) -> 96 MiB scoped.
    vmem_limit = max(32 * 1024 * 1024, min((vmem_cap * 3) // 4, 96 * 1024 * 1024))
    # ~8 MiB tiles: double-buffered in+out (4 live blocks) stays well under the
    # scoped limit while amortizing per-step overhead near the HBM roofline.
    tile_budget = min(8 * 1024 * 1024, vmem_limit // 5)

    tr_cap = max(g, (tile_budget // bytes_per_row) // g * g)
    min_steps = 8                                     # keep megacore sharding + pipelining
    tr_steps = max(g, _round_up(pl.cdiv(rows, min_steps), g))
    if rows <= g:
        tr = rows                                     # single block == full rows dim
    else:
        tr = max(g, min(tr_cap, tr_steps, (rows // g) * g))
    grid = (pl.cdiv(rows, tr),)                       # ragged last block clipped by Pallas

    flops = 8 * n_rows * d_model
    if pack:
        flops += 4 * rows * lanes * lanes             # two group-stat MXU matmuls
    cost = pl.CostEstimate(
        flops=int(flops),
        transcendentals=int(n_rows),
        bytes_accessed=int(2 * n_rows * d_model * itemsize + 2 * d_model * itemsize),
    )

    x_spec = pl.BlockSpec((tr, lanes), lambda i: (i, 0))
    wb_spec = pl.BlockSpec((1, lanes), lambda i: (0, 0))       # stays VMEM-resident
    if pack:
        in_specs = [x_spec, pl.BlockSpec((lanes, lanes), lambda i: (0, 0)), wb_spec, wb_spec]
        args = (xk, a_mat, wk, bk)
    else:
        in_specs = [x_spec, wb_spec, wb_spec]
        args = (xk, wk, bk)

    out = pl.pallas_call(
        kernel,
        out_shape=jax.ShapeDtypeStruct((rows, lanes), resid.dtype),
        grid_spec=pltpu.PrefetchScalarGridSpec(
            num_scalar_prefetch=0,
            grid=grid,
            in_specs=in_specs,
            out_specs=pl.BlockSpec((tr, lanes), lambda i: (i, 0)),
        ),
        compiler_params=pltpu.CompilerParams(
            dimension_semantics=("parallel",),        # row tiles shard across TCs (v7x)
            vmem_limit_bytes=int(vmem_limit),
        ),
        cost_estimate=cost,
    )(*args)

    return out.reshape(batch, pos, d_model)


def layernorm_ref(resid, w, b, *, eps=1e-5):
    mean = jnp.mean(resid, axis=-1, keepdims=True)
    xc = resid - mean
    var = jnp.mean(xc * xc, axis=-1, keepdims=True)
    return xc / jnp.sqrt(var + eps) * w + b


if __name__ == "__main__":
    # cfg: d_model=32, init_range=0.02, var_eps=1e-5
    d_model = 32
    init_range = 0.02
    var_eps = 1e-5
    batch, pos = 2, 8

    key = jax.random.PRNGKey(0)
    kx, kw = jax.random.split(key)
    resid = jax.random.normal(kx, (batch, pos, d_model), dtype=jnp.float32)
    # deterministic init matching nn.init.normal_(w, std=init_range), b = zeros
    w = init_range * jax.random.normal(kw, (d_model,), dtype=jnp.float32)
    b = jnp.zeros((d_model,), dtype=jnp.float32)

    out = layernorm(resid, w, b, eps=var_eps)
    out = jax.block_until_ready(out)

    ref = layernorm_ref(resid, w, b, eps=var_eps)
    assert out.shape == (batch, pos, d_model)
    # Tolerance covers MXU rounding in the packed-path group-stat matmuls.
    assert jnp.allclose(out, ref, atol=1e-4, rtol=1e-4), float(jnp.max(jnp.abs(out - ref)))
    print("KERNEL_OK")
</pallas_src>

<mosaic_0001>
module attributes {stable_mosaic.version = 11 : i64} {
  func.func @_ln_packed_kernel(%arg0: i32, %arg1: memref<4x128xf32, #tpu.memory_space<vmem>>, %arg2: memref<128x128xf32, #tpu.memory_space<vmem>>, %arg3: memref<1x128xf32, #tpu.memory_space<vmem>>, %arg4: memref<1x128xf32, #tpu.memory_space<vmem>>, %arg5: memref<4x128xf32, #tpu.memory_space<vmem>>) attributes {dimension_semantics = [#tpu.dimension_semantics<parallel>], iteration_bounds = array<i64: 1>, scalar_prefetch = 0 : i64, scratch_operands = 0 : i64, tpu.core_type = #tpu.core_type<tc>, window_params = [{transform_indices = @transform_0, window_bounds = array<i64: 4, 128>}, {pipeline_mode = #tpu.pipeline_mode<synchronous>, transform_indices = @transform_1, window_bounds = array<i64: 128, 128>}, {pipeline_mode = #tpu.pipeline_mode<synchronous>, transform_indices = @transform_2, window_bounds = array<i64: 1, 128>}, {pipeline_mode = #tpu.pipeline_mode<synchronous>, transform_indices = @transform_3, window_bounds = array<i64: 1, 128>}, {transform_indices = @transform_4, window_bounds = array<i64: 4, 128>}]} {
    %c0 = arith.constant 0 : index
    %c0_0 = arith.constant 0 : index
    %0 = vector.load %arg1[%c0, %c0_0] : memref<4x128xf32, #tpu.memory_space<vmem>>, vector<4x128xf32>
    %c0_1 = arith.constant 0 : index
    %c0_2 = arith.constant 0 : index
    %1 = vector.load %arg2[%c0_1, %c0_2] : memref<128x128xf32, #tpu.memory_space<vmem>>, vector<128x128xf32>
    %cst = arith.constant dense<0.000000e+00> : vector<4x128xf32>
    %2 = tpu.matmul %0, %1, %cst {dimension_numbers = #tpu.dot_dimension_numbers<[1], [0], [0], [1], [0, 0, 1, 1], [], []>} : vector<4x128xf32>, vector<128x128xf32>, vector<4x128xf32> -> vector<4x128xf32>
    %3 = arith.subf %0, %2 : vector<4x128xf32>
    %4 = arith.mulf %3, %3 : vector<4x128xf32>
    %cst_3 = arith.constant dense<0.000000e+00> : vector<4x128xf32>
    %5 = tpu.matmul %4, %1, %cst_3 {dimension_numbers = #tpu.dot_dimension_numbers<[1], [0], [0], [1], [0, 0, 1, 1], [], []>} : vector<4x128xf32>, vector<128x128xf32>, vector<4x128xf32> -> vector<4x128xf32>
    %cst_4 = arith.constant 0.000000e+00 : f32
    %6 = vector.broadcast %cst_4 : f32 to vector<4x128xf32>
    %7 = arith.maximumf %5, %6 : vector<4x128xf32>
    %cst_5 = arith.constant 9.99999974E-6 : f32
    %8 = vector.broadcast %cst_5 : f32 to vector<4x128xf32>
    %9 = arith.addf %7, %8 : vector<4x128xf32>
    %10 = math.rsqrt %9 : vector<4x128xf32>
    %11 = arith.mulf %3, %10 : vector<4x128xf32>
    %c0_6 = arith.constant 0 : index
    %c0_7 = arith.constant 0 : index
    %12 = vector.load %arg3[%c0_6, %c0_7] : memref<1x128xf32, #tpu.memory_space<vmem>>, vector<1x128xf32>
    %13 = vector.broadcast %12 : vector<1x128xf32> to vector<4x128xf32>
    %14 = arith.mulf %11, %13 : vector<4x128xf32>
    %c0_8 = arith.constant 0 : index
    %c0_9 = arith.constant 0 : index
    %15 = vector.load %arg4[%c0_8, %c0_9] : memref<1x128xf32, #tpu.memory_space<vmem>>, vector<1x128xf32>
    %16 = vector.broadcast %15 : vector<1x128xf32> to vector<4x128xf32>
    %17 = arith.addf %14, %16 : vector<4x128xf32>
    %c0_10 = arith.constant 0 : index
    %c0_11 = arith.constant 0 : index
    %18 = vector.load %arg5[%c0_10, %c0_11] : memref<4x128xf32, #tpu.memory_space<vmem>>, vector<4x128xf32>
    tpu.vector_store %arg5[%c0_10, %c0_11], %17 {strides = array<i32>} : memref<4x128xf32, #tpu.memory_space<vmem>>, vector<4x128xf32>,
    return
  }
  func.func @transform_0(%arg0: i32) -> (i32, i32) {
    %c0_i32 = arith.constant 0 : i32
    %c0_i32_0 = arith.constant 0 : i32
    return %arg0, %c0_i32 : i32, i32
  }
  func.func @transform_1(%arg0: i32) -> (i32, i32) {
    %c0_i32 = arith.constant 0 : i32
    %c0_i32_0 = arith.constant 0 : i32
    %c0_i32_1 = arith.constant 0 : i32
    return %c0_i32, %c0_i32_0 : i32, i32
  }
  func.func @transform_2(%arg0: i32) -> (i32, i32) {
    %c0_i32 = arith.constant 0 : i32
    %c0_i32_0 = arith.constant 0 : i32
    %c0_i32_1 = arith.constant 0 : i32
    return %c0_i32, %c0_i32_0 : i32, i32
  }
  func.func @transform_3(%arg0: i32) -> (i32, i32) {
    %c0_i32 = arith.constant 0 : i32
    %c0_i32_0 = arith.constant 0 : i32
    %c0_i32_1 = arith.constant 0 : i32
    return %c0_i32, %c0_i32_0 : i32, i32
  }
  func.func @transform_4(%arg0: i32) -> (i32, i32) {
    %c0_i32 = arith.constant 0 : i32
    %c0_i32_0 = arith.constant 0 : i32
    return %arg0, %c0_i32 : i32, i32
  }
}

</mosaic_0001>

<llo_original>
// kernel: tpu_custom_call.1
$region0: #{tpu_custom_call.1}
  #allocation0 [shape = 'u32[]', space=smem, size = 0x4, offset = 0x4, fixed_abs, tag = 'smem constant byte address 0x4 - core index']
  #allocation1 [shape = 'u32[144,128]{1,0:T(1,128)}', space=vmem, size = 0x12000, scoped, tag = 'internal scratch']
  %s0 = inlined_call_operand.hbm [shape: f32[4,128], index: 0, kind: input, shape index: {}]
  %s1 = inlined_call_operand.hbm [shape: f32[128,128], index: 1, kind: input, shape index: {}]
  %s2 = inlined_call_operand.vmem [shape: f32[1,128], index: 2, kind: input, shape index: {}]
  %s3 = inlined_call_operand.vmem [shape: f32[1,128], index: 3, kind: input, shape index: {}]
  %s4 = inlined_call_operand.hbm [shape: f32[4,128], index: 4, kind: output, shape index: {}]
  %s5 = sld [smem:[#allocation0]]
  $region34: #{tpu_custom_call.1} parent=0
    _
  %s7 = ssub.s32 1, %s5
  %s8 = scalar_select 0, %s7, %s5
  $region1: #{tpu_custom_call.1} parent=0
    #allocation2 [shape = 'u8[2048]{0}', space=vmem, size = 0x800, scoped, tag = 'input window, operand 0, single buffered']
    #allocation3 [shape = 's32[1]{0}', space=sflag, size = 0x4, scoped, tag = 'scoped memory for tpu_custom_call.1']
    #allocation4 [shape = 's32[1]{0}', space=sflag, size = 0x4, scoped, tag = 'scoped memory for tpu_custom_call.1']
    #allocation5 [shape = 'u8[65536]{0}', space=vmem, size = 0x10000, scoped, tag = 'input window, operand 1, single buffered']
    #allocation6 [shape = 's32[1]{0}', space=sflag, size = 0x4, scoped, tag = 'scoped memory for tpu_custom_call.1']
    #allocation7 [shape = 'u8[2048]{0}', space=vmem, size = 0x800, scoped, tag = 'output window, operand 0, single buffered']
    %9 = vsyncpa [#allocation3], 0
    %10 = vsyncpa [#allocation6], 0
    %11 = vsyncpa [#allocation4], 0
    // Predicated region
    $region2: #{tpu_custom_call.1} parent=1 // pred_check
      _
    $region3: #{tpu_custom_call.1} parent=1 // pred_check_branch
      %13 = sbr.rel (0) target = $region5
    $region4: #{tpu_custom_call.1} parent=1 // pred_region
      %s15 = ssub.s32 64, 64
      %16 = vsyncadd [#allocation3], %s15
      %s18 = sshll.u32 [#allocation2], 4
      %s19 = int_to_ptr.vmem [resolvable:$true] %s18
      %21 = dma.hbm_to_vmem [thread:$0]  %s0, 64, %s19, [#allocation3]
    $region5: #{tpu_custom_call.1} parent=1 // pred_fallthru
      _
    // Predicated region
    $region6: #{tpu_custom_call.1} parent=1 // pred_check
      _
    $region7: #{tpu_custom_call.1} parent=1 // pred_check_branch
      %23 = sbr.rel (0) target = $region9
    $region8: #{tpu_custom_call.1} parent=1 // pred_region
      %s25 = ssub.s32 2048, 2048
      %26 = vsyncadd [#allocation6], %s25
      %s27 = sshll.u32 [#allocation5], 4
      %s28 = int_to_ptr.vmem [resolvable:$true] %s27
      %33 = dma.hbm_to_vmem [thread:$0]  %s1, 2048, %s28, [#allocation6], 128, 128, 8
    $region9: #{tpu_custom_call.1} parent=1 // pred_fallthru
      _
    // Predicated region
    $region10: #{tpu_custom_call.1} parent=1 // pred_check
      _
    $region11: #{tpu_custom_call.1} parent=1 // pred_check_branch
      %35 = sbr.rel (0) target = $region13
    $region12: #{tpu_custom_call.1} parent=1 // pred_region
      _
    $region13: #{tpu_custom_call.1} parent=1 // pred_fallthru
      _
    // Predicated region
    $region14: #{tpu_custom_call.1} parent=1 // pred_check
      _
    $region15: #{tpu_custom_call.1} parent=1 // pred_check_branch
      %37 = sbr.rel (0) target = $region17
    $region16: #{tpu_custom_call.1} parent=1 // pred_region
      _
    $region17: #{tpu_custom_call.1} parent=1 // pred_fallthru
      _
    // Predicated region
    $region18: #{tpu_custom_call.1} parent=1 // pred_check
      _
    $region19: #{tpu_custom_call.1} parent=1 // pred_check_branch
      %39 = sbr.rel (0) target = $region21
    $region20: #{tpu_custom_call.1} parent=1 // pred_region
      %40 = dma.done [#allocation3], 64
    $region21: #{tpu_custom_call.1} parent=1 // pred_fallthru
      _
    // Predicated region
    $region22: #{tpu_custom_call.1} parent=1 // pred_check
      _
    $region23: #{tpu_custom_call.1} parent=1 // pred_check_branch
      %42 = sbr.rel (0) target = $region25
    $region24: #{tpu_custom_call.1} parent=1 // pred_region
      %43 = dma.done [#allocation6], 2048
    $region25: #{tpu_custom_call.1} parent=1 // pred_fallthru
      _
    %v44 = vld [vmem:[#allocation2] sm:$0xf]
    %v45 = vld [vmem:[#allocation5] sm:$0xff]
    %v46 = vld [vmem:[#allocation5 + $0x8] sm:$0xff]
    %v47 = vld [vmem:[#allocation5 + $0x10] sm:$0xff]
    %v48 = vld [vmem:[#allocation5 + $0x18] sm:$0xff]
    %v49 = vld [vmem:[#allocation5 + $0x20] sm:$0xff]
    %v50 = vld [vmem:[#allocation5 + $0x28] sm:$0xff]
    %v51 = vld [vmem:[#allocation5 + $0x30] sm:$0xff]
    %v52 = vld [vmem:[#allocation5 + $0x38] sm:$0xff]
    %v53 = vld [vmem:[#allocation5 + $0x40] sm:$0xff]
    %v54 = vld [vmem:[#allocation5 + $0x48] sm:$0xff]
    %v55 = vld [vmem:[#allocation5 + $0x50] sm:$0xff]
    %v56 = vld [vmem:[#allocation5 + $0x58] sm:$0xff]
    %v57 = vld [vmem:[#allocation5 + $0x60] sm:$0xff]
    %v58 = vld [vmem:[#allocation5 + $0x68] sm:$0xff]
    %v59 = vld [vmem:[#allocation5 + $0x70] sm:$0xff]
    %v60 = vld [vmem:[#allocation5 + $0x78] sm:$0xff]
    %61 = vmatprep.subr.mxu0 0.0
    %62 = vmatpush1.msra.mxu0 %v45
    %63 = vmatprep.subr.mxu0 0.0
    %64 = vmatpush1.msra.mxu0 %v46
    %65 = vmatprep.subr.mxu0 0.0
    %66 = vmatpush1.msra.mxu0 %v47
    %67 = vmatprep.subr.mxu0 0.0
    %68 = vmatpush1.msra.mxu0 %v48
    %69 = vmatprep.subr.mxu0 0.0
    %70 = vmatpush1.msra.mxu0 %v49
    %71 = vmatprep.subr.mxu0 0.0
    %72 = vmatpush1.msra.mxu0 %v50
    %73 = vmatprep.subr.mxu0 0.0
    %74 = vmatpush1.msra.mxu0 %v51
    %75 = vmatprep.subr.mxu0 0.0
    %76 = vmatpush1.msra.mxu0 %v52
    %77 = vmatprep.subr.mxu0 0.0
    %78 = vmatpush1.msra.mxu0 %v53
    %79 = vmatprep.subr.mxu0 0.0
    %80 = vmatpush1.msra.mxu0 %v54
    %81 = vmatprep.subr.mxu0 0.0
    %82 = vmatpush1.msra.mxu0 %v55
    %83 = vmatprep.subr.mxu0 0.0
    %84 = vmatpush1.msra.mxu0 %v56
    %85 = vmatprep.subr.mxu0 0.0
    %86 = vmatpush1.msra.mxu0 %v57
    %87 = vmatprep.subr.mxu0 0.0
    %88 = vmatpush1.msra.mxu0 %v58
    %89 = vmatprep.subr.mxu0 0.0
    %90 = vmatpush1.msra.mxu0 %v59
    %91 = vmatprep.subr.mxu0 0.0
    %92 = vmatpush1.msra.mxu0 %v60
    %93 = vmatprep.subr.mxu0 0.0
    %94 = vmatpush1.msra.mxu0 0.0
    %95 = vmatprep.subr.mxu0 0.0
    %96 = vmatpush1.msra.mxu0 0.0
    %97 = vmatprep.subr.mxu0 0.0
    %98 = vmatpush1.msra.mxu0 0.0
    %99 = vmatprep.subr.mxu0 0.0
    %100 = vmatpush1.msra.mxu0 0.0
    %101 = vmatprep.subr.mxu0 0.0
    %102 = vmatpush1.msra.mxu0 0.0
    %103 = vmatprep.subr.mxu0 0.0
    %104 = vmatpush1.msra.mxu0 0.0
    %105 = vmatprep.subr.mxu0 0.0
    %106 = vmatpush1.msra.mxu0 0.0
    %107 = vmatprep.subr.mxu0 0.0
    %108 = vmatpush1.msra.mxu0 0.0
    %109 = vmatprep.subr.mxu0 0.0
    %110 = vmatpush1.msra.mxu0 0.0
    %111 = vmatprep.subr.mxu0 0.0
    %112 = vmatpush1.msra.mxu0 0.0
    %113 = vmatprep.subr.mxu0 0.0
    %114 = vmatpush1.msra.mxu0 0.0
    %115 = vmatprep.subr.mxu0 0.0
    %116 = vmatpush1.msra.mxu0 0.0
    %117 = vmatprep.subr.mxu0 0.0
    %118 = vmatpush1.msra.mxu0 0.0
    %119 = vmatprep.subr.mxu0 0.0
    %120 = vmatpush1.msra.mxu0 0.0
    %121 = vmatprep.subr.mxu0 0.0
    %122 = vmatpush1.msra.mxu0 0.0
    %123 = vmatprep.subr.mxu0 0.0
    %124 = vmatpush1.msra.mxu0 0.0
    %125 = vmatprep.mubr.f32.mxu0 0.0
    %126 = vmatmul.mubr.f32.gmra.mrb[0].mxu0 %v44
    %v127 = vpop.f32.mrb[0].mxu0
    %v128 = vadd.f32 0.0, %v127
    %v129 = vpop.f32.mrb[0].mxu0
    %130 = vdwg.mxu0
    %v131 = vsub.f32 %v44, %v128
    %v132 = vmul.f32 %v131, %v131
    %133 = vmatprep.subr.mxu0 0.0
    %134 = vmatpush1.msra.mxu0 %v45
    %135 = vmatprep.subr.mxu0 0.0
    %136 = vmatpush1.msra.mxu0 %v46
    %137 = vmatprep.subr.mxu0 0.0
    %138 = vmatpush1.msra.mxu0 %v47
    %139 = vmatprep.subr.mxu0 0.0
    %140 = vmatpush1.msra.mxu0 %v48
    %141 = vmatprep.subr.mxu0 0.0
    %142 = vmatpush1.msra.mxu0 %v49
    %143 = vmatprep.subr.mxu0 0.0
    %144 = vmatpush1.msra.mxu0 %v50
    %145 = vmatprep.subr.mxu0 0.0
    %146 = vmatpush1.msra.mxu0 %v51
    %147 = vmatprep.subr.mxu0 0.0
    %148 = vmatpush1.msra.mxu0 %v52
    %149 = vmatprep.subr.mxu0 0.0
    %150 = vmatpush1.msra.mxu0 %v53
    %151 = vmatprep.subr.mxu0 0.0
    %152 = vmatpush1.msra.mxu0 %v54
    %153 = vmatprep.subr.mxu0 0.0
    %154 = vmatpush1.msra.mxu0 %v55
    %155 = vmatprep.subr.mxu0 0.0
    %156 = vmatpush1.msra.mxu0 %v56
    %157 = vmatprep.subr.mxu0 0.0
    %158 = vmatpush1.msra.mxu0 %v57
    %159 = vmatprep.subr.mxu0 0.0
    %160 = vmatpush1.msra.mxu0 %v58
    %161 = vmatprep.subr.mxu0 0.0
    %162 = vmatpush1.msra.mxu0 %v59
    %163 = vmatprep.subr.mxu0 0.0
    %164 = vmatpush1.msra.mxu0 %v60
    %165 = vmatprep.subr.mxu0 0.0
    %166 = vmatpush1.msra.mxu0 0.0
    %167 = vmatprep.subr.mxu0 0.0
    %168 = vmatpush1.msra.mxu0 0.0
    %169 = vmatprep.subr.mxu0 0.0
    %170 = vmatpush1.msra.mxu0 0.0
    %171 = vmatprep.subr.mxu0 0.0
    %172 = vmatpush1.msra.mxu0 0.0
    %173 = vmatprep.subr.mxu0 0.0
    %174 = vmatpush1.msra.mxu0 0.0
    %175 = vmatprep.subr.mxu0 0.0
    %176 = vmatpush1.msra.mxu0 0.0
    %177 = vmatprep.subr.mxu0 0.0
    %178 = vmatpush1.msra.mxu0 0.0
    %179 = vmatprep.subr.mxu0 0.0
    %180 = vmatpush1.msra.mxu0 0.0
    %181 = vmatprep.subr.mxu0 0.0
    %182 = vmatpush1.msra.mxu0 0.0
    %183 = vmatprep.subr.mxu0 0.0
    %184 = vmatpush1.msra.mxu0 0.0
    %185 = vmatprep.subr.mxu0 0.0
    %186 = vmatpush1.msra.mxu0 0.0
    %187 = vmatprep.subr.mxu0 0.0
    %188 = vmatpush1.msra.mxu0 0.0
    %189 = vmatprep.subr.mxu0 0.0
    %190 = vmatpush1.msra.mxu0 0.0
    %191 = vmatprep.subr.mxu0 0.0
    %192 = vmatpush1.msra.mxu0 0.0
    %193 = vmatprep.subr.mxu0 0.0
    %194 = vmatpush1.msra.mxu0 0.0
    %195 = vmatprep.subr.mxu0 0.0
    %196 = vmatpush1.msra.mxu0 0.0
    %197 = vmatprep.mubr.f32.mxu0 0.0
    %198 = vmatmul.mubr.f32.gmra.mrb[0].mxu0 %v132
    %v199 = vpop.f32.mrb[0].mxu0
    %v200 = vadd.f32 0.0, %v199
    %v201 = vpop.f32.mrb[0].mxu0
    %202 = vdwg.mxu0
    %v203 = vmax.f32 %v200, 0.0
    %v204 = vadd.f32 %v203, 1e-05
    %v205 = vrsqrt.pop %v204
    %v206 = vmul.f32 %v131, %v205
    %v207 = vld [vmem:[%s2] sm:$0x1]
    %v209 = vlaneseq
    %v210 = vshrl.u32 %v209, 7
    %v211 = vsub.s32 0, %v210
    %v212 = vrot.slane %v207, %v211
    %v214 = vmul.f32 %v206, %v212
    %v215 = vld [vmem:[%s3] sm:$0x1]
    %v217 = vlaneseq
    %v218 = vshrl.u32 %v217, 7
    %v219 = vsub.s32 0, %v218
    %v220 = vrot.slane %v215, %v219
    %v222 = vadd.f32 %v214, %v220
    %223 = vst [vmem:[#allocation7] sm:$0xf] %v222
    // Predicated region
    $region26: #{tpu_custom_call.1} parent=1 // pred_check
      _
    $region27: #{tpu_custom_call.1} parent=1 // pred_check_branch
      %225 = sbr.rel (0) target = $region29
    $region28: #{tpu_custom_call.1} parent=1 // pred_region
      %s227 = ssub.s32 64, 64
      %228 = vsyncadd [#allocation4], %s227
      %s230 = sshll.u32 [#allocation7], 4
      %s231 = int_to_ptr.vmem [resolvable:$true] %s230
      %233 = dma.vmem_to_hbm [thread:$0]  %s231, 64, %s4, [#allocation4]
    $region29: #{tpu_custom_call.1} parent=1 // pred_fallthru
      _
    // Predicated region
    $region30: #{tpu_custom_call.1} parent=1 // pred_check
      _
    $region31: #{tpu_custom_call.1} parent=1 // pred_check_branch
      %235 = sbr.rel (0) target = $region33
    $region32: #{tpu_custom_call.1} parent=1 // pred_region
      %236 = dma.done [#allocation4], 64
    $region33: #{tpu_custom_call.1} parent=1 // pred_fallthru
      _
    %237 = vsyncpa [#allocation3], 1
    %238 = vsyncpa [#allocation6], 1
    %239 = vsyncpa [#allocation4], 1

</llo_original>
